<compile_context>
chip_gen: v6e
topology: v6e:2x2x1
jax: 0.10.0
libtpu: 0.0.40
codegen_flags: <defaults>
</compile_context>

<pallas_src>
import math

import jax
import jax.numpy as jnp
from jax.experimental import pallas as pl
from jax.experimental.pallas import tpu as pltpu

MAX_CLAMP = 100.0
MIN_CLAMP = 0.001
SUPPORT = (-0.1, 1.1)

# ----------------------------------------------------------------------------
# Elementwise math helpers.
# ----------------------------------------------------------------------------

_LANCZOS_G = 7.0
_LANCZOS_COEF = (
    0.99999999999980993,
    676.5203681218851,
    -1259.1392167224028,
    771.32342877765313,
    -176.61502916214059,
    12.507343278686905,
    -0.13857109526572012,
    9.9843695780195716e-6,
    1.5056327351493116e-7,
)
_HALF_LOG_2PI = 0.5 * math.log(2.0 * math.pi)
# In lgamma(z1)+lgamma(z2)-lgamma(z3) with z3 = z1 + z2 - 1 the three "-t" terms and
# the three 0.5*log(2*pi) terms fold into this single constant.
_LOG_BETA_CONST = _HALF_LOG_2PI - (_LANCZOS_G + 0.5)


def _cdiv(a, b):
    return -(-a // b)


def _round_up(x, m):
    return ((x + m - 1) // m) * m


def _poly_mul(p, q):
    out = [0.0] * (len(p) + len(q) - 1)
    for i, a in enumerate(p):
        for j, b in enumerate(q):
            out[i + j] += a * b
    return out


def _rational_lanczos(scale=2.0 ** -40):
    """Expand A_g(z) = c0 + sum_i c_i/(z-1+i) into a single rational P(z)/Q(z).

    Coefficients (low -> high degree) are computed in float64 at import time and
    pre-scaled by `scale` (same factor on P and Q, so every ratio is unchanged) so
    that the triple products used in `_hardkuma_deterministic` stay inside float32
    range for z up to ~1101 (a >= MIN_CLAMP, b <= MAX_CLAMP).
    """
    n = len(_LANCZOS_COEF) - 1                    # 8 pole terms
    q = [1.0]
    for j in range(n):                            # Q(z) = prod_{j=0}^{7} (z + j)
        q = _poly_mul(q, [float(j), 1.0])
    p = [_LANCZOS_COEF[0] * c for c in q]         # c0 * Q(z)
    for i in range(1, n + 1):                     # + c_i * Q(z) / (z + i - 1)
        sub = [1.0]
        for j in range(n):
            if j != i - 1:
                sub = _poly_mul(sub, [float(j), 1.0])
        for d, c in enumerate(sub):
            p[d] += _LANCZOS_COEF[i] * c
    return tuple(c * scale for c in p), tuple(c * scale for c in q)


_LANCZOS_P, _LANCZOS_Q = _rational_lanczos()


def _horner(z, coeffs):
    """Evaluate a polynomial (coeffs low->high) with Horner; pure VALU FMAs."""
    acc = jnp.full_like(z, coeffs[-1])
    for c in coeffs[-2::-1]:
        acc = acc * z + c
    return acc


def _softplus(x):
    # numerically-stable log(1 + exp(x)); matches torch.nn.functional.softplus
    return jnp.maximum(x, 0.0) + jnp.log(1.0 + jnp.exp(-jnp.abs(x)))


def _hardkuma_deterministic(a, b):
    """Eval-mode HardKuma decision: argmax over {P(0), P(1), P(cont) -> mean}."""
    loc = SUPPORT[0]
    scale = SUPPORT[1] - SUPPORT[0]
    log_t0 = math.log((0.0 - loc) / scale)        # log(1/12)
    log_t1 = math.log((1.0 - loc) / scale)        # log(11/12)

    # --- discrete masses first (short chain, releases p0/p1/pc before the Lanczos
    # block -- keeps the number of live (TQ,TK) f32 temporaries down; v5e spill) ----
    # Kuma CDF F(x) = 1 - (1 - x**a)**b, evaluated at the stretched 0/1 points.
    p0 = 1.0 - jnp.exp(b * jnp.log(1.0 - jnp.exp(a * log_t0)))   # P(Z == 0)
    p1 = jnp.exp(b * jnp.log(1.0 - jnp.exp(a * log_t1)))         # P(Z == 1)
    pc = 1.0 - p0 - p1
    take_mean = (pc > p0) & (pc > p1)
    zero_one = jnp.where(p0 > p1, 0.0, 1.0)

    # --- continuous branch: mean of stretched Kuma ----------------------------------
    #   mean = loc + scale * Gamma(z1) * Gamma(z2) / Gamma(z3),
    #   z1 = 1 + 1/a, z2 = 1 + b, z3 = z1 + b  (all >= 1, so Lanczos applies directly).
    # Each lgamma uses the rational Lanczos A(z) = P(z)/Q(z); the three series terms
    # collapse into log((P1*P2*Q3) / (Q1*Q2*P3)) -> ONE reciprocal per element.
    inv_a = 1.0 / a                               # exact divide: approx recip is too
    z1 = 1.0 + inv_a                              # lossy at a ~= MIN_CLAMP (1/a ~ 1e3)
    z2 = 1.0 + b
    z3 = z1 + b
    n1 = _horner(z1, _LANCZOS_P)
    d1 = _horner(z1, _LANCZOS_Q)
    n2 = _horner(z2, _LANCZOS_P)
    d2 = _horner(z2, _LANCZOS_Q)
    n3 = _horner(z3, _LANCZOS_P)
    d3 = _horner(z3, _LANCZOS_Q)
    ratio = (n1 * n2) * d3 * pl.reciprocal((d1 * d2) * n3, approx=True)  # EUP vrcp
    g_off = _LANCZOS_G - 0.5
    log_beta = (
        _LOG_BETA_CONST
        + (z1 - 0.5) * jnp.log(z1 + g_off)
        + (z2 - 0.5) * jnp.log(z2 + g_off)
        - (z3 - 0.5) * jnp.log(z3 + g_off)
        + jnp.log(ratio)
    )
    hk_mean = loc + scale * jnp.exp(log_beta)

    return jnp.where(take_mean, hk_mean, zero_one)


# ----------------------------------------------------------------------------
# Pallas kernels.
# ----------------------------------------------------------------------------


def _proj_kernel(x_ref, w1_ref, b1_ref, w2_ref, b2_ref, h_ref):
    """Fused a/b-branch 2-layer MLP on a (rows, F) tile (Dropout == identity in eval).

    bf16 MXU operands with f32 accumulation; biases added in f32; bf16 output.
    """
    x = x_ref[0]                                                      # (rows, F) bf16
    h = jnp.dot(x, w1_ref[...], preferred_element_type=jnp.float32) + b1_ref[...]
    h = jnp.maximum(h, 0.0).astype(jnp.bfloat16)                      # ReLU
    h = jnp.dot(h, w2_ref[...], preferred_element_type=jnp.float32) + b2_ref[...]
    h_ref[0] = jnp.maximum(h, 0.0).astype(h_ref.dtype)                # (rows, 2*Hp)


def _score_hardkuma_kernel(pq_ref, pk_ref, z_ref):
    """Per (q-tile, k-tile): score matmuls + softplus/clamp + HardKuma decision."""
    pq = pq_ref[0]                                                    # (TQ, 2*Hp) bf16
    pk = pk_ref[0]                                                    # (TK, 2*Hp) bf16
    hp = pq.shape[1] // 2                                             # 128-lane aligned
    dims = (((1,), (1,)), ((), ()))                                   # contract hidden
    a = jax.lax.dot_general(pq[:, :hp], pk[:, :hp], dims,
                            preferred_element_type=jnp.float32)
    b = jax.lax.dot_general(pq[:, hp:], pk[:, hp:], dims,
                            preferred_element_type=jnp.float32)
    a = jnp.clip(_softplus(a), MIN_CLAMP, MAX_CLAMP)
    b = jnp.clip(_softplus(b), MIN_CLAMP, MAX_CLAMP)
    z_ref[0] = _hardkuma_deterministic(a, b)


# ----------------------------------------------------------------------------
# Wrapper: tile selection / weight fusion / pallas_call plumbing.
# ----------------------------------------------------------------------------


def _vmem_limit_bytes():
    """Generation-aware scoped-VMEM request: ~half of physical capacity (64 MiB on
    128 MiB v5e/v6e parts, 32 MiB on v7x's 64 MiB).  Blocks here are small; this just
    gives the pipeline headroom without over-reserving on v7x."""
    cap = 128 << 20
    try:
        cap = int(getattr(pltpu.get_tpu_info(), "vmem_capacity_bytes", cap))
    except Exception:
        pass
    return int(max(16 << 20, min(cap // 2, 64 << 20)))


def _pick_tile(length, max_tile, quantum, min_tiles=1, slack=1.0 / 16.0):
    """Pick (tile, padded_length): tile a multiple of `quantum`, <= max_tile, dividing
    padded_length.  Minimizes padded elements (every padded element runs the full
    HardKuma transcendental chain), preferring larger tiles (fewer grid steps) among
    candidates within `slack` of the minimum padding.  `min_tiles` is a best-effort
    lower bound on the number of tiles (keeps both v7x TensorCores fed when B == 1)."""
    length = max(int(length), 1)
    max_tile = max(quantum, (int(max_tile) // quantum) * quantum)
    n_max = _cdiv(length, quantum)
    cands = []
    for n in range(1, n_max + 1):
        tile = _round_up(_cdiv(length, n), quantum)
        if tile > max_tile:
            continue
        if n < min_tiles and n != n_max:
            continue
        cands.append((n * tile, tile))
    if not cands:
        return quantum, _round_up(length, quantum)
    min_pad = min(p for p, _ in cands)
    tile = max(t for p, t in cands if p <= min_pad * (1.0 + slack))
    return tile, _round_up(length, tile)


def kuma_attention_pallas(q, k, params, *, tile_q=256, tile_k=256):
    """Eval-mode KumaAttention forward.  q: (B, Lq, F), k: (B, Lk, F) -> (B, Lq, Lk)."""
    B, Lq, F = q.shape
    Bk, Lk, Fk = k.shape
    assert B == Bk and F == Fk
    H = params["w2a"].shape[1]
    f32, bf16 = jnp.float32, jnp.bfloat16

    Hp = _round_up(H, 128)                    # branch boundaries on 128-lane tiles
    min_tiles = 2 if B == 1 else 1            # v7x: >= 2 parallel grid steps

    TQ, Lqp = _pick_tile(Lq, tile_q, 8, min_tiles=min_tiles)
    if _round_up(Lk, 8) <= tile_k:            # single k tile: no 128-col padding needed
        Lkp = _round_up(Lk, 8)                # (compute is per-vreg anyway; this only
        TK = Lkp                              #  trims z HBM bytes for small Lk)
    else:
        TK, Lkp = _pick_tile(Lk, tile_k, 128)

    # --- fuse + pad the a/b-branch weights (a -> lanes [0,Hp), b -> [Hp,2Hp)) --------
    w1 = jnp.zeros((F, 2 * Hp), f32)
    w1 = w1.at[:, :H].set(params["w1a"]).at[:, Hp:Hp + H].set(params["w1b"])
    b1 = jnp.zeros((1, 2 * Hp), f32)
    b1 = b1.at[:, :H].set(params["b1a"]).at[:, Hp:Hp + H].set(params["b1b"])
    w2 = jnp.zeros((2 * Hp, 2 * Hp), f32)
    w2 = w2.at[:H, :H].set(params["w2a"]).at[Hp:Hp + H, Hp:Hp + H].set(params["w2b"])
    b2 = jnp.zeros((1, 2 * Hp), f32)
    b2 = b2.at[:, :H].set(params["b2a"]).at[:, Hp:Hp + H].set(params["b2b"])
    w1 = w1.astype(bf16)
    w2 = w2.astype(bf16)
    # TODO(synk): for H >= 128 split layer 2 into two (Hp,Hp) matmuls instead of the
    # 2Hpx2Hp block-diagonal (irrelevant at H=32).

    vmem = _vmem_limit_bytes()

    # --- stage 1: projections, run separately on q and k (no HBM concat / slice) -----
    def project(x, padded_len, row_tile):
        L = x.shape[1]
        if padded_len != L:
            x = jnp.pad(x, ((0, 0), (0, padded_len - L), (0, 0)))
        x = x.astype(bf16)
        return pl.pallas_call(
            _proj_kernel,
            out_shape=jax.ShapeDtypeStruct((B, padded_len, 2 * Hp), bf16),
            grid_spec=pltpu.PrefetchScalarGridSpec(
                num_scalar_prefetch=0,
                grid=(B, padded_len // row_tile),
                in_specs=[
                    pl.BlockSpec((1, row_tile, F), lambda b_, r: (b_, r, 0)),
                    pl.BlockSpec((F, 2 * Hp), lambda b_, r: (0, 0)),
                    pl.BlockSpec((1, 2 * Hp), lambda b_, r: (0, 0)),
                    pl.BlockSpec((2 * Hp, 2 * Hp), lambda b_, r: (0, 0)),
                    pl.BlockSpec((1, 2 * Hp), lambda b_, r: (0, 0)),
                ],
                out_specs=pl.BlockSpec((1, row_tile, 2 * Hp),
                                       lambda b_, r: (b_, r, 0)),
            ),
            compiler_params=pltpu.CompilerParams(
                dimension_semantics=("parallel", "parallel"),
                vmem_limit_bytes=vmem,
            ),
        )(x, w1, b1, w2, b2)

    proj_q = project(q, Lqp, TQ)      # (B, Lqp, 2Hp) bf16
    proj_k = project(k, Lkp, TK)      # (B, Lkp, 2Hp) bf16

    # --- stage 2: tiled scores + HardKuma decision ------------------------------------
    z = pl.pallas_call(
        _score_hardkuma_kernel,
        out_shape=jax.ShapeDtypeStruct((B, Lqp, Lkp), f32),
        grid_spec=pltpu.PrefetchScalarGridSpec(
            num_scalar_prefetch=0,
            grid=(B, Lqp // TQ, Lkp // TK),
            in_specs=[
                pl.BlockSpec((1, TQ, 2 * Hp), lambda b_, i, j: (b_, i, 0)),
                pl.BlockSpec((1, TK, 2 * Hp), lambda b_, i, j: (b_, j, 0)),
            ],
            out_specs=pl.BlockSpec((1, TQ, TK), lambda b_, i, j: (b_, i, j)),
        ),
        compiler_params=pltpu.CompilerParams(
            dimension_semantics=("parallel", "parallel", "parallel"),
            vmem_limit_bytes=vmem,
        ),
    )(proj_q, proj_k)

    if Lqp != Lq or Lkp != Lk:
        z = z[:, :Lq, :Lk]            # padded rows/cols carry garbage; always slice off
    return z


# ----------------------------------------------------------------------------
# Pure-JAX/XLA reference (f32 everywhere, lax.lgamma) for a correctness check.
# ----------------------------------------------------------------------------


def kuma_attention_ref(q, k, p):
    def mlp(x, w1, b1, w2, b2):
        h = jnp.maximum(jnp.einsum("bld,dh->blh", x, w1) + b1, 0.0)
        return jnp.maximum(jnp.einsum("blh,hk->blk", h, w2) + b2, 0.0)

    q_a = mlp(q, p["w1a"], p["b1a"], p["w2a"], p["b2a"])
    k_a = mlp(k, p["w1a"], p["b1a"], p["w2a"], p["b2a"])
    q_b = mlp(q, p["w1b"], p["b1b"], p["w2b"], p["b2b"])
    k_b = mlp(k, p["w1b"], p["b1b"], p["w2b"], p["b2b"])
    a = jnp.clip(_softplus(jnp.einsum("bqh,bkh->bqk", q_a, k_a)), MIN_CLAMP, MAX_CLAMP)
    b = jnp.clip(_softplus(jnp.einsum("bqh,bkh->bqk", q_b, k_b)), MIN_CLAMP, MAX_CLAMP)

    loc = SUPPORT[0]
    scale = SUPPORT[1] - SUPPORT[0]
    t0 = (0.0 - loc) / scale
    t1 = (1.0 - loc) / scale
    p0 = 1.0 - (1.0 - t0 ** a) ** b
    p1 = (1.0 - t1 ** a) ** b
    pc = 1.0 - p0 - p1
    lg = jax.lax.lgamma
    inv_a = 1.0 / a
    hk_mean = loc + scale * jnp.exp(lg(1.0 + inv_a) + lg(1.0 + b) - lg(1.0 + inv_a + b))
    zero_one = jnp.where(p0 > p1, 0.0, 1.0)
    return jnp.where((pc > p0) & (pc > p1), hk_mean, zero_one)


# ----------------------------------------------------------------------------
# Deterministic parameter init (torch.nn.Linear-style uniform init).
# ----------------------------------------------------------------------------


def init_params(key, in_features, out_features):
    ks = jax.random.split(key, 8)

    def lin(kw, kb, fan_in, fan_out):
        bound = 1.0 / math.sqrt(fan_in)
        w = jax.random.uniform(kw, (fan_in, fan_out), jnp.float32, -bound, bound)
        b = jax.random.uniform(kb, (1, fan_out), jnp.float32, -bound, bound)
        return w, b

    w1a, b1a = lin(ks[0], ks[1], in_features, out_features)
    w2a, b2a = lin(ks[2], ks[3], out_features, out_features)
    w1b, b1b = lin(ks[4], ks[5], in_features, out_features)
    w2b, b2b = lin(ks[6], ks[7], out_features, out_features)
    return dict(w1a=w1a, b1a=b1a, w2a=w2a, b2a=b2a,
                w1b=w1b, b1b=b1b, w2b=w2b, b2b=b2b)


if __name__ == "__main__":
    key = jax.random.PRNGKey(0)
    k_params, k_q, k_k = jax.random.split(key, 3)

    B, Lq, Lk, F, H = 2, 8, 8, 32, 32      # in_features = F, out_features = H
    params = init_params(k_params, F, H)
    q = jax.random.normal(k_q, (B, Lq, F), jnp.float32)
    k = jax.random.normal(k_k, (B, Lk, F), jnp.float32)

    z = jax.block_until_ready(kuma_attention_pallas(q, k, params))
    z_ref = kuma_attention_ref(q, k, params)

    assert z.shape == (B, Lq, Lk)
    assert bool(jnp.all(jnp.isfinite(z)))
    diff = jnp.abs(z - z_ref)
    # The kernel uses bf16 MXU operands, so the discrete (p0, p1, pc) argmax can flip
    # at near-ties (review: track a flip-rate metric, not just abs diff); continuous
    # (mean-path) elements must stay within a tight absolute tolerance.
    flip_rate = float(jnp.mean((diff > 0.1).astype(jnp.float32)))
    frac_close = float(jnp.mean((diff <= 2e-2).astype(jnp.float32)))
    assert flip_rate <= 0.10, f"flip_rate={flip_rate}"
    assert frac_close >= 0.90, f"frac_close={frac_close}"

    print("KERNEL_OK")
</pallas_src>

<mosaic_0001>
module attributes {stable_mosaic.version = 11 : i64} {
  func.func @_proj_kernel(%arg0: i32, %arg1: i32, %arg2: memref<1x8x32xbf16, #tpu.memory_space<vmem>>, %arg3: memref<32x256xbf16, #tpu.memory_space<vmem>>, %arg4: memref<1x256xf32, #tpu.memory_space<vmem>>, %arg5: memref<256x256xbf16, #tpu.memory_space<vmem>>, %arg6: memref<1x256xf32, #tpu.memory_space<vmem>>, %arg7: memref<1x8x256xbf16, #tpu.memory_space<vmem>>) attributes {dimension_semantics = [#tpu.dimension_semantics<parallel>, #tpu.dimension_semantics<parallel>], iteration_bounds = array<i64: 2, 1>, scalar_prefetch = 0 : i64, scratch_operands = 0 : i64, tpu.core_type = #tpu.core_type<tc>, window_params = [{transform_indices = @transform_0, window_bounds = array<i64: 1, 8, 32>}, {pipeline_mode = #tpu.pipeline_mode<synchronous>, transform_indices = @transform_1, window_bounds = array<i64: 32, 256>}, {pipeline_mode = #tpu.pipeline_mode<synchronous>, transform_indices = @transform_2, window_bounds = array<i64: 1, 256>}, {pipeline_mode = #tpu.pipeline_mode<synchronous>, transform_indices = @transform_3, window_bounds = array<i64: 256, 256>}, {pipeline_mode = #tpu.pipeline_mode<synchronous>, transform_indices = @transform_4, window_bounds = array<i64: 1, 256>}, {transform_indices = @transform_5, window_bounds = array<i64: 1, 8, 256>}]} {
    %c0 = arith.constant 0 : index
    %c0_0 = arith.constant 0 : index
    %c0_1 = arith.constant 0 : index
    %0 = vector.load %arg2[%c0, %c0_0, %c0_1] : memref<1x8x32xbf16, #tpu.memory_space<vmem>>, vector<1x8x32xbf16>
    %1 = vector.shape_cast %0 : vector<1x8x32xbf16> to vector<8x32xbf16>
    %c0_2 = arith.constant 0 : index
    %c0_3 = arith.constant 0 : index
    %2 = vector.load %arg3[%c0_2, %c0_3] : memref<32x256xbf16, #tpu.memory_space<vmem>>, vector<32x256xbf16>
    %cst = arith.constant dense<0.000000e+00> : vector<8x256xf32>
    %3 = tpu.matmul %1, %2, %cst {dimension_numbers = #tpu.dot_dimension_numbers<[1], [0], [0], [1], [0, 0, 1, 1], [], []>} : vector<8x32xbf16>, vector<32x256xbf16>, vector<8x256xf32> -> vector<8x256xf32>
    %c0_4 = arith.constant 0 : index
    %c0_5 = arith.constant 0 : index
    %4 = vector.load %arg4[%c0_4, %c0_5] : memref<1x256xf32, #tpu.memory_space<vmem>>, vector<1x256xf32>
    %5 = vector.broadcast %4 : vector<1x256xf32> to vector<8x256xf32>
    %6 = arith.addf %3, %5 : vector<8x256xf32>
    %cst_6 = arith.constant 0.000000e+00 : f32
    %7 = vector.broadcast %cst_6 : f32 to vector<8x256xf32>
    %8 = arith.maximumf %6, %7 : vector<8x256xf32>
    %9 = arith.truncf %8 : vector<8x256xf32> to vector<8x256xbf16>
    %c0_7 = arith.constant 0 : index
    %c0_8 = arith.constant 0 : index
    %10 = vector.load %arg5[%c0_7, %c0_8] : memref<256x256xbf16, #tpu.memory_space<vmem>>, vector<256x256xbf16>
    %cst_9 = arith.constant dense<0.000000e+00> : vector<8x256xf32>
    %11 = tpu.matmul %9, %10, %cst_9 {dimension_numbers = #tpu.dot_dimension_numbers<[1], [0], [0], [1], [0, 0, 1, 1], [], []>} : vector<8x256xbf16>, vector<256x256xbf16>, vector<8x256xf32> -> vector<8x256xf32>
    %c0_10 = arith.constant 0 : index
    %c0_11 = arith.constant 0 : index
    %12 = vector.load %arg6[%c0_10, %c0_11] : memref<1x256xf32, #tpu.memory_space<vmem>>, vector<1x256xf32>
    %13 = vector.broadcast %12 : vector<1x256xf32> to vector<8x256xf32>
    %14 = arith.addf %11, %13 : vector<8x256xf32>
    %cst_12 = arith.constant 0.000000e+00 : f32
    %15 = vector.broadcast %cst_12 : f32 to vector<8x256xf32>
    %16 = arith.maximumf %14, %15 : vector<8x256xf32>
    %17 = arith.truncf %16 : vector<8x256xf32> to vector<8x256xbf16>
    %c0_13 = arith.constant 0 : index
    %c0_14 = arith.constant 0 : index
    %c0_15 = arith.constant 0 : index
    %18 = vector.load %arg7[%c0_13, %c0_14, %c0_15] : memref<1x8x256xbf16, #tpu.memory_space<vmem>>, vector<1x8x256xbf16>
    %19 = vector.shape_cast %18 : vector<1x8x256xbf16> to vector<8x256xbf16>
    %20 = vector.shape_cast %17 : vector<8x256xbf16> to vector<1x8x256xbf16>
    tpu.vector_store %arg7[%c0_13, %c0_14, %c0_15], %20 {strides = array<i32>} : memref<1x8x256xbf16, #tpu.memory_space<vmem>>, vector<1x8x256xbf16>,
    return
  }
  func.func @transform_0(%arg0: i32, %arg1: i32) -> (i32, i32, i32) {
    %c0_i32 = arith.constant 0 : i32
    %c0_i32_0 = arith.constant 0 : i32
    return %arg0, %arg1, %c0_i32 : i32, i32, i32
  }
  func.func @transform_1(%arg0: i32, %arg1: i32) -> (i32, i32) {
    %c0_i32 = arith.constant 0 : i32
    %c0_i32_0 = arith.constant 0 : i32
    %c0_i32_1 = arith.constant 0 : i32
    return %c0_i32, %c0_i32_0 : i32, i32
  }
  func.func @transform_2(%arg0: i32, %arg1: i32) -> (i32, i32) {
    %c0_i32 = arith.constant 0 : i32
    %c0_i32_0 = arith.constant 0 : i32
    %c0_i32_1 = arith.constant 0 : i32
    return %c0_i32, %c0_i32_0 : i32, i32
  }
  func.func @transform_3(%arg0: i32, %arg1: i32) -> (i32, i32) {
    %c0_i32 = arith.constant 0 : i32
    %c0_i32_0 = arith.constant 0 : i32
    %c0_i32_1 = arith.constant 0 : i32
    return %c0_i32, %c0_i32_0 : i32, i32
  }
  func.func @transform_4(%arg0: i32, %arg1: i32) -> (i32, i32) {
    %c0_i32 = arith.constant 0 : i32
    %c0_i32_0 = arith.constant 0 : i32
    %c0_i32_1 = arith.constant 0 : i32
    return %c0_i32, %c0_i32_0 : i32, i32
  }
  func.func @transform_5(%arg0: i32, %arg1: i32) -> (i32, i32, i32) {
    %c0_i32 = arith.constant 0 : i32
    %c0_i32_0 = arith.constant 0 : i32
    return %arg0, %arg1, %c0_i32 : i32, i32, i32
  }
}

</mosaic_0001>

<llo_original>
// kernel: tpu_custom_call.1
$region0: #{tpu_custom_call.1}
  #allocation0 [shape = 'u32[]', space=smem, size = 0x4, offset = 0x4, fixed_abs, tag = 'smem constant byte address 0x4 - core index']
  #allocation1 [shape = 'u32[144,128]{1,0:T(1,128)}', space=vmem, size = 0x12000, scoped, tag = 'internal scratch']
  %s0 = inlined_call_operand.hbm [shape: bf16[2,8,32], index: 0, kind: input, shape index: {}]
  %s1 = inlined_call_operand.hbm [shape: bf16[32,256], index: 1, kind: input, shape index: {}]
  %s2 = inlined_call_operand.vmem [shape: f32[1,256], index: 2, kind: input, shape index: {}]
  %s3 = inlined_call_operand.hbm [shape: bf16[256,256], index: 3, kind: input, shape index: {}]
  %s4 = inlined_call_operand.vmem [shape: f32[1,256], index: 4, kind: input, shape index: {}]
  %s5 = inlined_call_operand.hbm [shape: bf16[2,8,256], index: 5, kind: output, shape index: {}]
  %s6 = sld [smem:[#allocation0]]
  $region65: #{tpu_custom_call.1} parent=0
    _
  %s8 = ssub.s32 1, %s6
  %s9 = scalar_select 0, %s8, %s6
  $region1: #{tpu_custom_call.1} parent=0
    #allocation2 [shape = 'u8[4096]{0}', space=vmem, size = 0x1000, scoped, tag = 'input window, operand 0']
    #allocation3 [shape = 's32[2]{0}', space=sflag, size = 0x8, scoped, tag = 'scoped memory for tpu_custom_call.1']
    #allocation4 [shape = 's32[2]{0}', space=sflag, size = 0x8, scoped, tag = 'scoped memory for tpu_custom_call.1']
    #allocation5 [shape = 'u8[16384]{0}', space=vmem, size = 0x4000, scoped, tag = 'input window, operand 1, single buffered']
    #allocation6 [shape = 's32[1]{0}', space=sflag, size = 0x4, scoped, tag = 'scoped memory for tpu_custom_call.1']
    #allocation7 [shape = 'u8[131072]{0}', space=vmem, size = 0x20000, scoped, tag = 'input window, operand 3, single buffered']
    #allocation8 [shape = 'u8[8192]{0}', space=vmem, size = 0x2000, scoped, tag = 'output window, operand 0']
    %10 = vsyncpa [#allocation3], 0
    %s11 = scalar_lea.sflag [#allocation3], 1
    %12 = vsyncpa %s11, 0
    %13 = vsyncpa [#allocation6], 0
    %14 = vsyncpa [#allocation4], 0
    %s15 = scalar_lea.sflag [#allocation4], 1
    %16 = vsyncpa %s15, 0
    loop: start=0, step=1, limit=4
    $region2: #{tpu_custom_call.1} parent=1 // loop_pre_header
      _
    $region3: #{tpu_custom_call.1} parent=1 // loop_header
      %s18 = sphi 0, %s22
      %p19 = scmp.ge.s32.totalorder %s18, 4
      %s25 = sphi 0, %s37
      %s26 = sphi 0, %s33
      %s27 = sphi 0, %s25
      %s28 = sphi 0, %s26
      %s29 = sphi 0, %s27
      %s30 = sphi 0, %s28
      %s42 = sphi 0, %s44
      %s45 = sphi 0, %s42
      %s46 = sphi 0, %s45
      %s62 = sphi 0, %s46
      %s66 = sphi 0, %s66
      %s68 = sphi 0, %s66
      %s69 = sphi 0, %s68
      %s83 = sphi 0, %s69
      %s87 = sphi 0, %s87
      %s89 = sphi 0, %s87
      %s90 = sphi 0, %s89
      %s104 = sphi 0, %s90
      %s108 = sphi 0, %s108
      %s110 = sphi 0, %s108
      %s111 = sphi 0, %s110
      %s125 = sphi 0, %s111
      %s129 = sphi 0, %s129
      %s131 = sphi 0, %s129
      %s132 = sphi 0, %s131
      %s146 = sphi 0, %s132
      %s154 = sphi 0, %s156
      %s157 = sphi 0, %s154
      %s158 = sphi 0, %s157
      %s174 = sphi 0, %s158
    $region4: #{tpu_custom_call.1} parent=1 // loop_header_branch
      %21 = sbr.rel (%p19) target = $region8
    $region5: #{tpu_custom_call.1} parent=1 // loop_body
      %s23 = ssub.s32 %s18, 1
      %s24 = ssub.s32 %s18, 2
      %s31 = sadd.s32 1, %s26
      %p32 = scmp.ge.s32.totalorder %s31, 1
      %s33 = scalar_select %p32, 0, %s31
      %s34 = sadd.s32 1, %s25
      %s35 = scalar_select %p32, %s34, %s25
      %p36 = scmp.ge.s32.totalorder %s35, 2
      %s37 = scalar_select %p36, 0, %s35
      %s38 = ssub.s32 %s25, %s37
      %s39 = ssub.s32 %s26, %s33
      %s40 = sor.u32 %s38, %s39
      %p41 = scmp.eq.s32.totalorder %s40, 0
      %s43 = sadd.s32 %s42, 1
      %s44 = scalar_select %p41, %s42, %s43
      %p47 = pneg %p41
      %p48 = scmp.eq.s32.totalorder %s18, 1
      %p49 = por %p47, %p48
      %p50 = scmp.ne.s32.totalorder %s42, %s45
      %p51 = scmp.eq.s32.totalorder %s18, 0
      %p52 = por %p50, %p51
      %p53 = scmp.ne.s32.totalorder %s42, %s45
      %p54 = scmp.eq.s32.totalorder %s23, 1
      %p55 = por %p53, %p54
      %p56 = scmp.ne.s32.totalorder %s45, %s46
      %p57 = scmp.eq.s32.totalorder %s23, 0
      %p58 = por %p56, %p57
      %p59 = scmp.ne.s32.totalorder %s45, %s46
      %p60 = scmp.eq.s32.totalorder %s24, 1
      %p61 = por %p59, %p60
      %p63 = scmp.ne.s32.totalorder %s46, %s62
      %p64 = scmp.eq.s32.totalorder %s24, 0
      %p65 = por %p63, %p64
      %s67 = sadd.s32 %s66, 1
      %p70 = scmp.eq.s32.totalorder %s18, 1
      %p71 = scmp.ne.s32.totalorder %s66, %s68
      %p72 = scmp.eq.s32.totalorder %s18, 0
      %p73 = por %p71, %p72
      %p74 = scmp.ne.s32.totalorder %s66, %s68
      %p75 = scmp.eq.s32.totalorder %s23, 1
      %p76 = por %p74, %p75
      %p77 = scmp.ne.s32.totalorder %s68, %s69
      %p78 = scmp.eq.s32.totalorder %s23, 0
      %p79 = por %p77, %p78
      %p80 = scmp.ne.s32.totalorder %s68, %s69
      %p81 = scmp.eq.s32.totalorder %s24, 1
      %p82 = por %p80, %p81
      %p84 = scmp.ne.s32.totalorder %s69, %s83
      %p85 = scmp.eq.s32.totalorder %s24, 0
      %p86 = por %p84, %p85
      %s88 = sadd.s32 %s87, 1
      %p91 = scmp.eq.s32.totalorder %s18, 1
      %p92 = scmp.ne.s32.totalorder %s87, %s89
      %p93 = scmp.eq.s32.totalorder %s18, 0
      %p94 = por %p92, %p93
      %p95 = scmp.ne.s32.totalorder %s87, %s89
      %p96 = scmp.eq.s32.totalorder %s23, 1
      %p97 = por %p95, %p96
      %p98 = scmp.ne.s32.totalorder %s89, %s90
      %p99 = scmp.eq.s32.totalorder %s23, 0
      %p100 = por %p98, %p99
      %p101 = scmp.ne.s32.totalorder %s89, %s90
      %p102 = scmp.eq.s32.totalorder %s24, 1
      %p103 = por %p101, %p102
      %p105 = scmp.ne.s32.totalorder %s90, %s104
      %p106 = scmp.eq.s32.totalorder %s24, 0
      %p107 = por %p105, %p106
      %s109 = sadd.s32 %s108, 1
      %p112 = scmp.eq.s32.totalorder %s18, 1
      %p113 = scmp.ne.s32.totalorder %s108, %s110
      %p114 = scmp.eq.s32.totalorder %s18, 0
      %p115 = por %p113, %p114
      %p116 = scmp.ne.s32.totalorder %s108, %s110
      %p117 = scmp.eq.s32.totalorder %s23, 1
      %p118 = por %p116, %p117
      %p119 = scmp.ne.s32.totalorder %s110, %s111
      %p120 = scmp.eq.s32.totalorder %s23, 0
      %p121 = por %p119, %p120
      %p122 = scmp.ne.s32.totalorder %s110, %s111
      %p123 = scmp.eq.s32.totalorder %s24, 1
      %p124 = por %p122, %p123
      %p126 = scmp.ne.s32.totalorder %s111, %s125
      %p127 = scmp.eq.s32.totalorder %s24, 0
      %p128 = por %p126, %p127
      %s130 = sadd.s32 %s129, 1
      %p133 = scmp.eq.s32.totalorder %s18, 1
      %p134 = scmp.ne.s32.totalorder %s129, %s131
      %p135 = scmp.eq.s32.totalorder %s18, 0
      %p136 = por %p134, %p135
      %p137 = scmp.ne.s32.totalorder %s129, %s131
      %p138 = scmp.eq.s32.totalorder %s23, 1
      %p139 = por %p137, %p138
      %p140 = scmp.ne.s32.totalorder %s131, %s132
      %p141 = scmp.eq.s32.totalorder %s23, 0
      %p142 = por %p140, %p141
      %p143 = scmp.ne.s32.totalorder %s131, %s132
      %p144 = scmp.eq.s32.totalorder %s24, 1
      %p145 = por %p143, %p144
      %p147 = scmp.ne.s32.totalorder %s132, %s146
      %p148 = scmp.eq.s32.totalorder %s24, 0
      %p149 = por %p147, %p148
      %s150 = ssub.s32 %s25, %s37
      %s151 = ssub.s32 %s26, %s33
      %s152 = sor.u32 %s150, %s151
      %p153 = scmp.eq.s32.totalorder %s152, 0
      %s155 = sadd.s32 %s154, 1
      %s156 = scalar_select %p153, %s154, %s155
      %p159 = pneg %p153
      %p160 = scmp.eq.s32.totalorder %s18, 1
      %p161 = por %p159, %p160
      %p162 = scmp.ne.s32.totalorder %s154, %s157
      %p163 = scmp.eq.s32.totalorder %s18, 0
      %p164 = por %p162, %p163
      %p165 = scmp.ne.s32.totalorder %s154, %s157
      %p166 = scmp.eq.s32.totalorder %s23, 1
      %p167 = por %p165, %p166
      %p168 = scmp.ne.s32.totalorder %s157, %s158
      %p169 = scmp.eq.s32.totalorder %s23, 0
      %p170 = por %p168, %p169
      %p171 = scmp.ne.s32.totalorder %s157, %s158
      %p172 = scmp.eq.s32.totalorder %s24, 1
      %p173 = por %p171, %p172
      %p175 = scmp.ne.s32.totalorder %s158, %s174
      %p176 = scmp.eq.s32.totalorder %s24, 0
      %p177 = por %p175, %p176
      %p178 = scmp.le.s32.totalorder 1, %s18
      %p179 = scmp.lt.s32.totalorder %s18, 3
      %p180 = pnand %p178, %p179
      %p181 = pneg %p180
      // Predicated region
      $region9: #{tpu_custom_call.1} parent=5 // pred_check
        _
      $region10: #{tpu_custom_call.1} parent=5 // pred_check_branch
        %183 = sbr.rel (%p180) target = $region12
      $region11: #{tpu_custom_call.1} parent=5 // pred_region
        %s184 = ssub.s32 %s18, 1
        // Predicated region
        $region13: #{tpu_custom_call.1} parent=11 // pred_check
          %p185 = pneg %p79
        $region14: #{tpu_custom_call.1} parent=11 // pred_check_branch
          %187 = sbr.rel (%p185) target = $region16
        $region15: #{tpu_custom_call.1} parent=11 // pred_region
          %s189 = ssub.s32 512, 512
          %190 = vsyncadd [#allocation6], %s189
          %s191 = sshll.u32 [#allocation5], 4
          %s192 = int_to_ptr.vmem [resolvable:$true] %s191
          %197 = dma.hbm_to_vmem [thread:$0]  %s1, 512, %s192, [#allocation6], 128, 128, 8
        $region16: #{tpu_custom_call.1} parent=11 // pred_fallthru
          _
        // Predicated region
        $region17: #{tpu_custom_call.1} parent=11 // pred_check
          %p198 = pneg %p100
        $region18: #{tpu_custom_call.1} parent=11 // pred_check_branch
          %200 = sbr.rel (%p198) target = $region20
        $region19: #{tpu_custom_call.1} parent=11 // pred_region
          _
        $region20: #{tpu_custom_call.1} parent=11 // pred_fallthru
          _
        // Predicated region
        $region21: #{tpu_custom_call.1} parent=11 // pred_check
          %p201 = pneg %p121
        $region22: #{tpu_custom_call.1} parent=11 // pred_check_branch
          %203 = sbr.rel (%p201) target = $region24
        $region23: #{tpu_custom_call.1} parent=11 // pred_region
          %s205 = ssub.s32 4096, 4096
          %206 = vsyncadd [#allocation6], %s205
          %s207 = sshll.u32 [#allocation7], 4
          %s208 = int_to_ptr.vmem [resolvable:$true] %s207
          %213 = dma.hbm_to_vmem [thread:$0]  %s3, 4096, %s208, [#allocation6], 128, 128, 8
        $region24: #{tpu_custom_call.1} parent=11 // pred_fallthru
          _
        // Predicated region
        $region25: #{tpu_custom_call.1} parent=11 // pred_check
          %p214 = pneg %p142
        $region26: #{tpu_custom_call.1} parent=11 // pred_check_branch
          %216 = sbr.rel (%p214) target = $region28
        $region27: #{tpu_custom_call.1} parent=11 // pred_region
          _
        $region28: #{tpu_custom_call.1} parent=11 // pred_fallthru
          _
      $region12: #{tpu_custom_call.1} parent=5 // pred_fallthru
        _
      %p217 = scmp.lt.s32.totalorder %s18, 2
      // Predicated region
      $region29: #{tpu_custom_call.1} parent=5 // pred_check
        %p218 = pneg %p217
      $region30: #{tpu_custom_call.1} parent=5 // pred_check_branch
        %220 = sbr.rel (%p218) target = $region32
      $region31: #{tpu_custom_call.1} parent=5 // pred_region
        // Predicated region
        $region33: #{tpu_custom_call.1} parent=31 // pred_check
          %p221 = pneg %p52
        $region34: #{tpu_custom_call.1} parent=31 // pred_check_branch
          %223 = sbr.rel (%p221) target = $region36
        $region35: #{tpu_custom_call.1} parent=31 // pred_region
          %s224 = sand.u32 %s42, 1
          %s225 = scalar_lea.sflag [#allocation3], %s224
          %s226 = sand.u32 %s42, 1
          %s227 = smul.addr %s226, 4
          %s228 = scalar_lea.vmem [#allocation2], %s227
          %s230 = ssub.s32 64, 64
          %231 = vsyncadd %s225, %s230
          %s232 = sadd.s32 %s26, %s25
          %s233 = smul.addr %s232, 64
          %s234 = scalar_lea.hbm %s0, %s233
          %s236 = sshll.u32 %s228, 4
          %s237 = int_to_ptr.vmem [resolvable:$true] %s236
          %239 = dma.hbm_to_vmem [thread:$0]  %s234, 64, %s237, %s225
        $region36: #{tpu_custom_call.1} parent=31 // pred_fallthru
          _
      $region32: #{tpu_custom_call.1} parent=5 // pred_fallthru
        _
      %p240 = scmp.le.s32.totalorder 1, %s18
      %p241 = scmp.lt.s32.totalorder %s18, 3
      %p242 = pnand %p240, %p241
      %p243 = pneg %p242
      // Predicated region
      $region37: #{tpu_custom_call.1} parent=5 // pred_check
        _
      $region38: #{tpu_custom_call.1} parent=5 // pred_check_branch
        %245 = sbr.rel (%p242) target = $region40
      $region39: #{tpu_custom_call.1} parent=5 // pred_region
        %s246 = ssub.s32 %s18, 1
        %s247 = sand.u32 %s45, 1
        %s248 = scalar_lea.sflag [#allocation3], %s247
        %s249 = sand.u32 %s45, 1
        %s250 = smul.addr %s249, 4
        %s251 = scalar_lea.vmem [#allocation2], %s250
        // Predicated region
        $region41: #{tpu_custom_call.1} parent=39 // pred_check
          %p252 = pneg %p58
        $region42: #{tpu_custom_call.1} parent=39 // pred_check_branch
          %254 = sbr.rel (%p252) target = $region44
        $region43: #{tpu_custom_call.1} parent=39 // pred_region
          %255 = dma.done %s248, 64
        $region44: #{tpu_custom_call.1} parent=39 // pred_fallthru
          _
        // Predicated region
        $region45: #{tpu_custom_call.1} parent=39 // pred_check
          %p256 = pneg %p79
        $region46: #{tpu_custom_call.1} parent=39 // pred_check_branch
          %258 = sbr.rel (%p256) target = $region48
        $region47: #{tpu_custom_call.1} parent=39 // pred_region
          %259 = dma.done [#allocation6], 512
        $region48: #{tpu_custom_call.1} parent=39 // pred_fallthru
          _
        // Predicated region
        $region49: #{tpu_custom_call.1} parent=39 // pred_check
          %p260 = pneg %p121
        $region50: #{tpu_custom_call.1} parent=39 // pred_check_branch
          %262 = sbr.rel (%p260) target = $region52
        $region51: #{tpu_custom_call.1} parent=39 // pred_region
          %263 = dma.done [#allocation6], 4096
        $region52: #{tpu_custom_call.1} parent=39 // pred_fallthru
          _
        %s264 = sand.u32 %s45, 1
        %s265 = scalar_lea.sflag [#allocation3], %s264
        %s266 = sand.u32 %s45, 1
        %s267 = smul.addr %s266, 4
        %s268 = scalar_lea.vmem [#allocation2], %s267
        %p269 = pneg %p58
        %p270 = pneg %p55
        %p271 = pneg %p79
        %p272 = pneg %p76
        %p273 = pneg %p100
        %p274 = pneg %p97
        %p275 = pneg %p121
        %p276 = pneg %p118
        %p277 = pneg %p142
        %p278 = pneg %p139
        %p279 = pneg %p170
        %p280 = pneg %p167
        %s281 = sand.u32 %s157, 1
        %s282 = scalar_lea.sflag [#allocation4], %s281
        %s283 = sand.u32 %s157, 1
        %s284 = smul.addr %s283, 8
        %s285 = scalar_lea.vmem [#allocation8], %s284
        %v287 = vld [vmem:[%s251] sm:$0xf]
        %v288 = vld [vmem:[#allocation5] sm:$0xff]
        %v289 = vld [vmem:[#allocation5 + $0x8] sm:$0xff]
        %v290 = vld [vmem:[#allocation5 + $0x10] sm:$0xff]
        %v291 = vld [vmem:[#allocation5 + $0x18] sm:$0xff]
        %v292 = vld [vmem:[%s2] sm:$0x3]
        %v294 = vlaneseq
        %v295 = vshrl.u32 %v294, 7
        %v296 = vsub.s32 0, %v295
        %v297 = vrot.slane %v292, %v296
        %v298 = vlaneseq
        %v299 = vshrl.u32 %v298, 7
        %v300 = vsub.s32 1, %v299
        %v301 = vrot.slane %v292, %v300
        %v308 = vunpack.c.l.b16 %v288
        %v309 = vunpack.c.h.b16 %v288
        %v310 = vunpack.c.l.b16 %v289
        %v311 = vunpack.c.h.b16 %v289
        %v312 = vunpack.c.l.b16 %v290
        %v313 = vunpack.c.h.b16 %v290
        %v314 = vunpack.c.l.b16 %v291
        %v315 = vunpack.c.h.b16 %v291
        %v316 = vpack.c.b16 %v310, %v308
        %v317 = vpack.c.b16 %v311, %v309
        %v318 = vpack.c.b16 %v314, %v312
        %v319 = vpack.c.b16 %v315, %v313
        %vm324 = vcmask 261120
        %v326 = vsel %vm324, %v287, 0
        %328 = vmatprep.subr.bf16.mxu0 0
        %329 = vmatpush1.bf16.msra.mxu0 0
        %330 = vmatprep.subr.bf16.mxu0 0
        %331 = vmatpush1.bf16.msra.mxu0 0
        %332 = vmatprep.subr.bf16.mxu0 0
        %333 = vmatpush1.bf16.msra.mxu0 0
        %334 = vmatprep.subr.bf16.mxu0 0
        %335 = vmatpush1.bf16.msra.mxu0 0
        %336 = vmatprep.subr.bf16.mxu0 0
        %337 = vmatpush1.bf16.msra.mxu0 0
        %338 = vmatprep.subr.bf16.mxu0 0
        %339 = vmatpush1.bf16.msra.mxu0 0
        %340 = vmatprep.subr.bf16.mxu0 %v319
        %341 = vmatpush1.bf16.msra.mxu0 %v318
        %342 = vmatprep.subr.bf16.mxu0 %v317
        %343 = vmatpush1.bf16.msra.mxu0 %v316
        %344 = vmatprep.subr.bf16.mxu0 0
        %345 = vmatpush2.bf16.msra.mxu0 0
        %346 = vmatprep.subr.bf16.mxu0 0
        %347 = vmatpush2.bf16.msra.mxu0 0
        %348 = vmatprep.subr.bf16.mxu0 0
        %349 = vmatpush2.bf16.msra.mxu0 0
        %350 = vmatprep.subr.bf16.mxu0 0
        %351 = vmatpush2.bf16.msra.mxu0 0
        %352 = vmatprep.subr.bf16.mxu0 0
        %353 = vmatpush2.bf16.msra.mxu0 0
        %354 = vmatprep.subr.bf16.mxu0 0
        %355 = vmatpush2.bf16.msra.mxu0 0
        %356 = vmatprep.subr.bf16.mxu0 0
        %357 = vmatpush2.bf16.msra.mxu0 0
        %358 = vmatprep.subr.bf16.mxu0 0
        %359 = vmatpush2.bf16.msra.mxu0 0
        %360 = vmatprep.mubr.bf16.mxu0 0
        %361 = vmatmul.mubr.bf16.gmra.mxu0 %v326
        %v362 = vpop.f32.mrf.mxu0
        %v363 = vadd.f32 %v297, %v362
        %v364 = vpop.f32.mrf.mxu0
        %v365 = vadd.f32 %v301, %v364
        %v366 = vpop.f32.mrf.mxu0
        %v367 = vpop.f32.mrf.mxu0
        %368 = vdwg.mxu0
        %v369 = vmax.f32 %v363, 0.0
        %v370 = vmax.f32 %v365, 0.0
        %v371 = vpack.c.bf16 %v369, %v369
        %v372 = vpack.c.bf16 %v370, %v370
        %v373 = vld [vmem:[#allocation7] sm:$0xff]
        %v374 = vld [vmem:[#allocation7 + $0x8] sm:$0xff]
        %v375 = vld [vmem:[#allocation7 + $0x10] sm:$0xff]
        %v376 = vld [vmem:[#allocation7 + $0x18] sm:$0xff]
        %v377 = vld [vmem:[#allocation7 + $0x20] sm:$0xff]
        %v378 = vld [vmem:[#allocation7 + $0x28] sm:$0xff]
        %v379 = vld [vmem:[#allocation7 + $0x30] sm:$0xff]
        %v380 = vld [vmem:[#allocation7 + $0x38] sm:$0xff]
        %v381 = vld [vmem:[#allocation7 + $0x40] sm:$0xff]
        %v382 = vld [vmem:[#allocation7 + $0x48] sm:$0xff]
        %v383 = vld [vmem:[#allocation7 + $0x50] sm:$0xff]
        %v384 = vld [vmem:[#allocation7 + $0x58] sm:$0xff]
        %v385 = vld [vmem:[#allocation7 + $0x60] sm:$0xff]
        %v386 = vld [vmem:[#allocation7 + $0x68] sm:$0xff]
        %v387 = vld [vmem:[#allocation7 + $0x70] sm:$0xff]
        %v388 = vld [vmem:[#allocation7 + $0x78] sm:$0xff]
        %v389 = vld [vmem:[#allocation7 + $0x80] sm:$0xff]
        %v390 = vld [vmem:[#allocation7 + $0x88] sm:$0xff]
        %v391 = vld [vmem:[#allocation7 + $0x90] sm:$0xff]
        %v392 = vld [vmem:[#allocation7 + $0x98] sm:$0xff]
        %v393 = vld [vmem:[#allocation7 + $0xa0] sm:$0xff]
        %v394 = vld [vmem:[#allocation7 + $0xa8] sm:$0xff]
        %v395 = vld [vmem:[#allocation7 + $0xb0] sm:$0xff]
        %v396 = vld [vmem:[#allocation7 + $0xb8] sm:$0xff]
        %v397 = vld [vmem:[#allocation7 + $0xc0] sm:$0xff]
        %v398 = vld [vmem:[#allocation7 + $0xc8] sm:$0xff]
        %v399 = vld [vmem:[#allocation7 + $0xd0] sm:$0xff]
        %v400 = vld [vmem:[#allocation7 + $0xd8] sm:$0xff]
        %v401 = vld [vmem:[#allocation7 + $0xe0] sm:$0xff]
        %v402 = vld [vmem:[#allocation7 + $0xe8] sm:$0xff]
        %v403 = vld [vmem:[#allocation7 + $0xf0] sm:$0xff]
        %v404 = vld [vmem:[#allocation7 + $0xf8] sm:$0xff]
        %v405 = vld [vmem:[%s4] sm:$0x3]
        %v407 = vlaneseq
        %v408 = vshrl.u32 %v407, 7
        %v409 = vsub.s32 0, %v408
        %v410 = vrot.slane %v405, %v409
        %v411 = vlaneseq
        %v412 = vshrl.u32 %v411, 7
        %v413 = vsub.s32 1, %v412
        %v414 = vrot.slane %v405, %v413
        %v449 = vunpack.c.l.b16 %v373
        %v450 = vunpack.c.h.b16 %v373
        %v451 = vunpack.c.l.b16 %v374
        %v452 = vunpack.c.h.b16 %v374
        %v453 = vunpack.c.l.b16 %v375
        %v454 = vunpack.c.h.b16 %v375
        %v455 = vunpack.c.l.b16 %v376
        %v456 = vunpack.c.h.b16 %v376
        %v457 = vunpack.c.l.b16 %v377
        %v458 = vunpack.c.h.b16 %v377
        %v459 = vunpack.c.l.b16 %v378
        %v460 = vunpack.c.h.b16 %v378
        %v461 = vunpack.c.l.b16 %v379
        %v462 = vunpack.c.h.b16 %v379
        %v463 = vunpack.c.l.b16 %v380
        %v464 = vunpack.c.h.b16 %v380
        %v465 = vunpack.c.l.b16 %v381
        %v466 = vunpack.c.h.b16 %v381
        %v467 = vunpack.c.l.b16 %v382
        %v468 = vunpack.c.h.b16 %v382
        %v469 = vunpack.c.l.b16 %v383
        %v470 = vunpack.c.h.b16 %v383
        %v471 = vunpack.c.l.b16 %v384
        %v472 = vunpack.c.h.b16 %v384
        %v473 = vunpack.c.l.b16 %v385
        %v474 = vunpack.c.h.b16 %v385
        %v475 = vunpack.c.l.b16 %v386
        %v476 = vunpack.c.h.b16 %v386
        %v477 = vunpack.c.l.b16 %v387
        %v478 = vunpack.c.h.b16 %v387
        %v479 = vunpack.c.l.b16 %v388
        %v480 = vunpack.c.h.b16 %v388
        %v481 = vunpack.c.l.b16 %v389
        %v482 = vunpack.c.h.b16 %v389
        %v483 = vunpack.c.l.b16 %v390
        %v484 = vunpack.c.h.b16 %v390
        %v485 = vunpack.c.l.b16 %v391
        %v486 = vunpack.c.h.b16 %v391
        %v487 = vunpack.c.l.b16 %v392
        %v488 = vunpack.c.h.b16 %v392
        %v489 = vunpack.c.l.b16 %v393
        %v490 = vunpack.c.h.b16 %v393
        %v491 = vunpack.c.l.b16 %v394
        %v492 = vunpack.c.h.b16 %v394
        %v493 = vunpack.c.l.b16 %v395
        %v494 = vunpack.c.h.b16 %v395
        %v495 = vunpack.c.l.b16 %v396
        %v496 = vunpack.c.h.b16 %v396
        %v497 = vunpack.c.l.b16 %v397
        %v498 = vunpack.c.h.b16 %v397
        %v499 = vunpack.c.l.b16 %v398
        %v500 = vunpack.c.h.b16 %v398
        %v501 = vunpack.c.l.b16 %v399
        %v502 = vunpack.c.h.b16 %v399
        %v503 = vunpack.c.l.b16 %v400
        %v504 = vunpack.c.h.b16 %v400
        %v505 = vunpack.c.l.b16 %v401
        %v506 = vunpack.c.h.b16 %v401
        %v507 = vunpack.c.l.b16 %v402
        %v508 = vunpack.c.h.b16 %v402
        %v509 = vunpack.c.l.b16 %v403
        %v510 = vunpack.c.h.b16 %v403
        %v511 = vunpack.c.l.b16 %v404
        %v512 = vunpack.c.h.b16 %v404
        %v513 = vpack.c.b16 %v451, %v449
        %v514 = vpack.c.b16 %v452, %v450
        %v515 = vpack.c.b16 %v455, %v453
        %v516 = vpack.c.b16 %v456, %v454
        %v517 = vpack.c.b16 %v459, %v457
        %v518 = vpack.c.b16 %v460, %v458
        %v519 = vpack.c.b16 %v463, %v461
        %v520 = vpack.c.b16 %v464, %v462
        %v521 = vpack.c.b16 %v467, %v465
        %v522 = vpack.c.b16 %v468, %v466
        %v523 = vpack.c.b16 %v471, %v469
        %v524 = vpack.c.b16 %v472, %v470
        %v525 = vpack.c.b16 %v475, %v473
        %v526 = vpack.c.b16 %v476, %v474
        %v527 = vpack.c.b16 %v479, %v477
        %v528 = vpack.c.b16 %v480, %v478
        %v529 = vpack.c.b16 %v483, %v481
        %v530 = vpack.c.b16 %v484, %v482
        %v531 = vpack.c.b16 %v487, %v485
        %v532 = vpack.c.b16 %v488, %v486
        %v533 = vpack.c.b16 %v491, %v489
        %v534 = vpack.c.b16 %v492, %v490
        %v535 = vpack.c.b16 %v495, %v493
        %v536 = vpack.c.b16 %v496, %v494
        %v537 = vpack.c.b16 %v499, %v497
        %v538 = vpack.c.b16 %v500, %v498
        %v539 = vpack.c.b16 %v503, %v501
        %v540 = vpack.c.b16 %v504, %v502
        %v541 = vpack.c.b16 %v507, %v505
        %v542 = vpack.c.b16 %v508, %v506
        %v543 = vpack.c.b16 %v511, %v509
        %v544 = vpack.c.b16 %v512, %v510
        %577 = vmatprep.subr.bf16.mxu0 %v528
        %578 = vmatpush1.bf16.msra.mxu0 %v527
        %579 = vmatprep.subr.bf16.mxu0 %v526
        %580 = vmatpush1.bf16.msra.mxu0 %v525
        %581 = vmatprep.subr.bf16.mxu0 %v524
        %582 = vmatpush1.bf16.msra.mxu0 %v523
        %583 = vmatprep.subr.bf16.mxu0 %v522
        %584 = vmatpush1.bf16.msra.mxu0 %v521
        %585 = vmatprep.subr.bf16.mxu0 %v520
        %586 = vmatpush1.bf16.msra.mxu0 %v519
        %587 = vmatprep.subr.bf16.mxu0 %v518
        %588 = vmatpush1.bf16.msra.mxu0 %v517
        %589 = vmatprep.subr.bf16.mxu0 %v516
        %590 = vmatpush1.bf16.msra.mxu0 %v515
        %591 = vmatprep.subr.bf16.mxu0 %v514
        %592 = vmatpush1.bf16.msra.mxu0 %v513
        %593 = vmatprep.subr.bf16.mxu0 %v544
        %594 = vmatpush2.bf16.msra.mxu0 %v543
        %595 = vmatprep.subr.bf16.mxu0 %v542
        %596 = vmatpush2.bf16.msra.mxu0 %v541
        %597 = vmatprep.subr.bf16.mxu0 %v540
        %598 = vmatpush2.bf16.msra.mxu0 %v539
        %599 = vmatprep.subr.bf16.mxu0 %v538
        %600 = vmatpush2.bf16.msra.mxu0 %v537
        %601 = vmatprep.subr.bf16.mxu0 %v536
        %602 = vmatpush2.bf16.msra.mxu0 %v535
        %603 = vmatprep.subr.bf16.mxu0 %v534
        %604 = vmatpush2.bf16.msra.mxu0 %v533
        %605 = vmatprep.subr.bf16.mxu0 %v532
        %606 = vmatpush2.bf16.msra.mxu0 %v531
        %607 = vmatprep.subr.bf16.mxu0 %v530
        %608 = vmatpush2.bf16.msra.mxu0 %v529
        %609 = vmatprep.mubr.bf16.mxu0 %v372
        %610 = vmatmul.mubr.bf16.gmra.mxu0 %v371
        %v611 = vpop.f32.mrf.mxu0
        %v612 = vadd.f32 %v410, %v611
        %v613 = vpop.f32.mrf.mxu0
        %v614 = vadd.f32 %v414, %v613
        %v615 = vpop.f32.mrf.mxu0
        %v616 = vpop.f32.mrf.mxu0
        %617 = vdwg.mxu0
        %v618 = vmax.f32 %v612, 0.0
        %v619 = vmax.f32 %v614, 0.0
        %v620 = vpack.c.bf16 %v618, %v618
        %v621 = vpack.c.bf16 %v619, %v619
        %v624 = vunpack.c.l.b16 %v620
        %v625 = vunpack.c.l.b16 %v621
        %v626 = vpack.c.b16 %v625, %v624
        %628 = vst [vmem:[%s285] sm:$0xff] %v626
        %s629 = sand.u32 %s157, 1
        %s630 = scalar_lea.sflag [#allocation4], %s629
        %s631 = sand.u32 %s157, 1
        %s632 = smul.addr %s631, 8
        %s633 = scalar_lea.vmem [#allocation8], %s632
        // Predicated region
        $region53: #{tpu_custom_call.1} parent=39 // pred_check
          %p634 = pneg %p167
        $region54: #{tpu_custom_call.1} parent=39 // pred_check_branch
          %636 = sbr.rel (%p634) target = $region56
        $region55: #{tpu_custom_call.1} parent=39 // pred_region
          %s638 = ssub.s32 128, 128
          %639 = vsyncadd %s630, %s638
          %s640 = smul.addr %s28, 2
          %s641 = smul.addr %s27, 2
          %s642 = sadd.s32 %s640, %s641
          %s643 = smul.addr %s642, 64
          %s644 = scalar_lea.hbm %s5, %s643
          %s646 = sshll.u32 %s633, 4
          %s647 = int_to_ptr.vmem [resolvable:$true] %s646
          %649 = dma.vmem_to_hbm [thread:$0]  %s647, 128, %s644, %s630
        $region56: #{tpu_custom_call.1} parent=39 // pred_fallthru
          _
      $region40: #{tpu_custom_call.1} parent=5 // pred_fallthru
        _
      %p650 = scmp.le.s32.totalorder 2, %s18
      // Predicated region
      $region57: #{tpu_custom_call.1} parent=5 // pred_check
        %p651 = pneg %p650
      $region58: #{tpu_custom_call.1} parent=5 // pred_check_branch
        %653 = sbr.rel (%p651) target = $region60
      $region59: #{tpu_custom_call.1} parent=5 // pred_region
        %s654 = ssub.s32 %s18, 2
        // Predicated region
        $region61: #{tpu_custom_call.1} parent=59 // pred_check
          %p655 = pneg %p173
        $region62: #{tpu_custom_call.1} parent=59 // pred_check_branch
          %657 = sbr.rel (%p655) target = $region64
        $region63: #{tpu_custom_call.1} parent=59 // pred_region
          %s658 = sand.u32 %s158, 1
          %s659 = scalar_lea.sflag [#allocation4], %s658
          %s660 = sand.u32 %s158, 1
          %s661 = smul.addr %s660, 8
          %s662 = scalar_lea.vmem [#allocation8], %s661
          %663 = dma.done %s659, 128
        $region64: #{tpu_custom_call.1} parent=59 // pred_fallthru
          _
      $region60: #{tpu_custom_call.1} parent=5 // pred_fallthru
        _
    $region6: #{tpu_custom_call.1} parent=1 // loop_footer
      %s22 = sadd.s32 1, %s18
    $region7: #{tpu_custom_call.1} parent=1 // loop_footer_branch
      %17 = sbr.rel target = $region3
    $region8: #{tpu_custom_call.1} parent=1 // loop_exit
      _
    %664 = vsyncpa [#allocation3], 1
    %s665 = scalar_lea.sflag [#allocation3], 1
    %666 = vsyncpa %s665, 1
    %667 = vsyncpa [#allocation6], 1
    %668 = vsyncpa [#allocation4], 1
    %s669 = scalar_lea.sflag [#allocation4], 1
    %670 = vsyncpa %s669, 1

</llo_original>
